<compile_context>
chip_gen: v5e
topology: v5e:2x2
jax: 0.10.0
libtpu: 0.0.40
codegen_flags: <defaults>
</compile_context>

<pallas_src>
import jax
import jax.numpy as jnp
from jax.experimental import pallas as pl
from jax.experimental.pallas import tpu as pltpu


def _round_up(x, m):
    return (x + m - 1) // m * m


# --------------------- hardware queries (with safe fallbacks) ---------------------

def _vmem_capacity_bytes():
    try:
        return int(pltpu.get_tpu_info().vmem_capacity_bytes)
    except Exception:
        return 64 << 20            # conservative: v7x has 64 MiB per TensorCore


def _device_kind():
    try:
        return jax.devices()[0].device_kind.lower()
    except Exception:
        return "unknown"


def _default_tiles(kind):
    """Streaming-mode (tile_m, tile_ff) defaults per generation."""
    if "v5" in kind:
        return 256, 512            # v5e: 4x128^2 MXU, balanced around ~240 flops/byte
    if "v6" in kind:
        return 768, 1024           # v6e: needs ~650-700 flops per weight byte
    return 512, 1024               # v7x / unknown: 64 MiB VMEM, 2 TCs share HBM


# ----------------------------- VMEM footprint models ------------------------------

def _resident_footprint(tile_m, d_model_p, d_ff_p, out_isz, w_bufs):
    weights = w_bufs * 2 * d_model_p * d_ff_p * 2          # bf16 w1 + w2
    biases = w_bufs * 8 * (d_ff_p + d_model_p) * 4         # f32, sublane-padded
    x_tiles = 2 * tile_m * d_model_p * 2                   # bf16, double-buffered
    o_tiles = 2 * tile_m * d_model_p * out_isz             # output, double-buffered
    hidden = tile_m * d_ff_p * (4 + 2)                     # f32 h + its bf16 copy
    y_tmp = tile_m * d_model_p * 4                         # f32 second-dot result
    return weights + biases + x_tiles + o_tiles + hidden + y_tmp


def _streaming_footprint(tile_m, tile_ff, d_model_p, out_isz):
    w_slabs = 2 * 2 * d_model_p * tile_ff * 2               # bf16 w1/w2 slabs, x2 buffers
    biases = 2 * 8 * (tile_ff + d_model_p) * 4
    x_tiles = 2 * tile_m * d_model_p * 2
    o_tiles = 2 * tile_m * d_model_p * out_isz
    acc = tile_m * d_model_p * 4                            # f32 accumulator scratch
    hidden = tile_m * tile_ff * (4 + 2)                     # f32 h + bf16 copy
    contrib = tile_m * d_model_p * 4                        # second-dot result before +=
    return w_slabs + biases + x_tiles + o_tiles + acc + hidden + contrib


def _pick_tile_ff(d_ff_p, want):
    """Largest multiple of 128 <= want that divides d_ff_p (>= 128)."""
    want = max(128, min(want, d_ff_p))
    t = (want // 128) * 128
    while t > 128 and d_ff_p % t != 0:
        t -= 128
    return t


# ----------------------------------- kernels --------------------------------------

def ffn_kernel_resident(x_ref, w1_ref, b1_ref, w2_ref, b2_ref, o_ref):
    # Full bf16 weights resident in VMEM (constant index_map); one M tile/step.
    h = jnp.dot(x_ref[...], w1_ref[...], preferred_element_type=jnp.float32)
    # Bias + ReLU epilogue in f32 (v5e-safe); dropout -> identity in eval mode.
    h = jnp.maximum(h + b1_ref[...], 0.0)
    y = jnp.dot(h.astype(w2_ref.dtype), w2_ref[...],
                preferred_element_type=jnp.float32)
    o_ref[...] = (y + b2_ref[...]).astype(o_ref.dtype)


def ffn_kernel_streaming(x_ref, w1_ref, b1_ref, w2_ref, b2_ref, o_ref, acc_ref):
    # Grid = (M tiles, d_ff slabs); d_ff is the (last, "arbitrary") reduction axis.
    k = pl.program_id(1)

    @pl.when(k == 0)
    def _():
        acc_ref[...] = jnp.zeros_like(acc_ref)

    h = jnp.dot(x_ref[...], w1_ref[...], preferred_element_type=jnp.float32)
    h = jnp.maximum(h + b1_ref[...], 0.0)
    acc_ref[...] += jnp.dot(h.astype(w2_ref.dtype), w2_ref[...],
                            preferred_element_type=jnp.float32)

    @pl.when(k == pl.num_programs(1) - 1)
    def _():
        # b2 added exactly once, at the final reduction step.
        o_ref[...] = (acc_ref[...] + b2_ref[...]).astype(o_ref.dtype)


# --------------------------------- host wrapper ------------------------------------

def prepare_ffn_params(w1, b1, w2, b2):
    """One-time weight prep (pad to 128 multiples + bf16 cast), hoisted out of
    the per-call path. Zero padding is exact through the FFN."""
    d_model, d_ff = w1.shape
    assert w2.shape == (d_ff, d_model)
    d_model_p = _round_up(d_model, 128)
    d_ff_p = _round_up(d_ff, 128)
    w1_p = jnp.zeros((d_model_p, d_ff_p), jnp.bfloat16).at[:d_model, :d_ff].set(
        jnp.asarray(w1, jnp.bfloat16))
    w2_p = jnp.zeros((d_ff_p, d_model_p), jnp.bfloat16).at[:d_ff, :d_model].set(
        jnp.asarray(w2, jnp.bfloat16))
    b1_p = jnp.zeros((1, d_ff_p), jnp.float32).at[0, :d_ff].set(
        jnp.asarray(b1, jnp.float32))
    b2_p = jnp.zeros((1, d_model_p), jnp.float32).at[0, :d_model].set(
        jnp.asarray(b2, jnp.float32))
    return {"w1": w1_p, "b1": b1_p, "w2": w2_p, "b2": b2_p,
            "d_model": d_model, "d_ff": d_ff}


def positionwise_feed_forward(x, params, *, tile_m=None, tile_ff=None):
    """x: (batch, seq, d_model). params: dict from prepare_ffn_params (or a raw
    (w1, b1, w2, b2) tuple). Returns (batch, seq, d_model) in x.dtype."""
    if not isinstance(params, dict):
        params = prepare_ffn_params(*params)

    d_model, d_ff = params["d_model"], params["d_ff"]
    w1_p, b1_p, w2_p, b2_p = params["w1"], params["b1"], params["w2"], params["b2"]
    d_model_p, d_ff_p = w1_p.shape

    batch, seq, dm = x.shape
    assert dm == d_model
    M = batch * seq
    out_dtype = x.dtype
    out_isz = max(jnp.dtype(out_dtype).itemsize, 2)

    kind = _device_kind()
    vmem_cap = _vmem_capacity_bytes()
    vmem_ceiling = int(vmem_cap * 0.875)          # generation-aware cap w/ headroom

    tm_pref, tff_pref = _default_tiles(kind)
    if tile_m is not None:
        tm_pref = max(16, _round_up(tile_m, 16))
    if tile_ff is not None:
        tff_pref = max(128, _round_up(tile_ff, 128))
    # bf16 packs 16 sublanes per vreg; don't over-pad tiny inputs.
    tm_pref = max(16, min(tm_pref, _round_up(M, 16)))

    # ---- mode selection: resident weights (preferred) vs streamed slabs ----
    tm_cands = []
    t = tm_pref
    while True:
        tm_cands.append(t)
        if t <= 16:
            break
        t = max(16, (t // 2) // 16 * 16)

    resident = False
    res_wbufs = 2
    tm = tm_pref
    tff = d_ff_p
    for cand in tm_cands:
        for wbufs in (2, 1):
            if _resident_footprint(cand, d_model_p, d_ff_p, out_isz, wbufs) <= vmem_ceiling:
                resident, tm, res_wbufs = True, cand, wbufs
                break
        if resident:
            break

    if not resident:
        tff = _pick_tile_ff(d_ff_p, tff_pref)
        tm = tm_pref
        while _streaming_footprint(tm, tff, d_model_p, out_isz) > vmem_ceiling:
            if tm > 128:
                tm = max(128, (tm // 2) // 16 * 16)
            elif tff > 128:
                tff = _pick_tile_ff(d_ff_p, tff - 128)
            elif tm > 16:
                tm = max(16, (tm // 2) // 16 * 16)
            else:
                break

    # v7x has 2 TensorCores: make sure the "parallel" M axis has >= 2 tiles.
    if "v7" in kind or "7x" in kind:
        while _round_up(M, tm) // tm < 2 and tm >= 32:
            tm = max(16, (tm // 2) // 16 * 16)

    M_p = _round_up(M, tm)
    n_m = M_p // tm

    # ---- x prep: cast/pad only when actually needed ----
    x2d = x.reshape(M, d_model)
    if x2d.dtype != jnp.bfloat16:
        x2d = x2d.astype(jnp.bfloat16)
    if (M_p, d_model_p) != (M, d_model):
        x2d = jnp.pad(x2d, ((0, M_p - M), (0, d_model_p - d_model)))

    # ---- VMEM limit + cost estimate ----
    if resident:
        footprint = _resident_footprint(tm, d_model_p, d_ff_p, out_isz, res_wbufs)
        weight_reads = 1
    else:
        footprint = _streaming_footprint(tm, tff, d_model_p, out_isz)
        weight_reads = n_m

    vmem_limit = int(min(max(int(footprint * 1.3), 32 << 20), vmem_ceiling))
    vmem_limit = min(max(vmem_limit, footprint + (2 << 20)), vmem_cap)

    cost = pl.CostEstimate(
        flops=4 * M * d_model * d_ff,                                # two matmuls
        transcendentals=0,
        bytes_accessed=int(
            M * d_model * x.dtype.itemsize                            # x read
            + M * d_model * jnp.dtype(out_dtype).itemsize             # out write
            + weight_reads * 2 * d_model_p * d_ff_p * 2               # bf16 weights
            + (d_ff_p + d_model_p) * 4),                              # biases
    )

    # ---- specs / grid ----
    if resident:
        def wspec(shape):
            if res_wbufs == 1:
                # VMEM-tight: do not double-buffer the resident weights.
                return pl.BlockSpec(shape, lambda i: (0, 0),
                                    pipeline_mode=pl.Buffered(1))
            return pl.BlockSpec(shape, lambda i: (0, 0))

        grid_spec = pltpu.PrefetchScalarGridSpec(
            num_scalar_prefetch=0,
            grid=(n_m,),
            in_specs=[
                pl.BlockSpec((tm, d_model_p), lambda i: (i, 0)),       # x tile
                wspec((d_model_p, d_ff_p)),                            # w1 (resident)
                wspec((1, d_ff_p)),                                    # b1
                wspec((d_ff_p, d_model_p)),                            # w2 (resident)
                wspec((1, d_model_p)),                                 # b2
            ],
            out_specs=pl.BlockSpec((tm, d_model_p), lambda i: (i, 0)),
            scratch_shapes=[],
        )
        kernel = ffn_kernel_resident
        dims = ("parallel",)
    else:
        grid_spec = pltpu.PrefetchScalarGridSpec(
            num_scalar_prefetch=0,
            grid=(n_m, d_ff_p // tff),
            in_specs=[
                pl.BlockSpec((tm, d_model_p), lambda i, k: (i, 0)),    # x tile
                pl.BlockSpec((d_model_p, tff), lambda i, k: (0, k)),   # w1 slab
                pl.BlockSpec((1, tff), lambda i, k: (0, k)),           # b1 slab
                pl.BlockSpec((tff, d_model_p), lambda i, k: (k, 0)),   # w2 slab
                pl.BlockSpec((1, d_model_p), lambda i, k: (0, 0)),     # b2
            ],
            out_specs=pl.BlockSpec((tm, d_model_p), lambda i, k: (i, 0)),
            scratch_shapes=[pltpu.VMEM((tm, d_model_p), jnp.float32)],
        )
        kernel = ffn_kernel_streaming
        dims = ("parallel", "arbitrary")

    out2d = pl.pallas_call(
        kernel,
        out_shape=jax.ShapeDtypeStruct((M_p, d_model_p), out_dtype),
        grid_spec=grid_spec,
        compiler_params=pltpu.CompilerParams(
            dimension_semantics=dims,
            vmem_limit_bytes=vmem_limit,
        ),
        cost_estimate=cost,
    )(x2d, w1_p, b1_p, w2_p, b2_p)

    return out2d[:M, :d_model].reshape(batch, seq, d_model)


def init_params(key, d_model, d_ff):
    """Deterministic init mimicking torch.nn.Linear defaults (uniform +-1/sqrt(fan_in))."""
    k1, k2, k3, k4 = jax.random.split(key, 4)
    bound1 = 1.0 / (d_model ** 0.5)
    bound2 = 1.0 / (d_ff ** 0.5)
    # stored already transposed for row-major x @ W
    w1 = jax.random.uniform(k1, (d_model, d_ff), jnp.float32, -bound1, bound1)
    b1 = jax.random.uniform(k2, (d_ff,), jnp.float32, -bound1, bound1)
    w2 = jax.random.uniform(k3, (d_ff, d_model), jnp.float32, -bound2, bound2)
    b2 = jax.random.uniform(k4, (d_model,), jnp.float32, -bound2, bound2)
    return w1, b1, w2, b2


if __name__ == "__main__":
    key = jax.random.PRNGKey(0)
    batch, seq, d_model, d_ff = 2, 8, 32, 64

    kx, kp = jax.random.split(key)
    x = jax.random.normal(kx, (batch, seq, d_model), jnp.float32)
    w1, b1, w2, b2 = init_params(kp, d_model, d_ff)

    params = prepare_ffn_params(w1, b1, w2, b2)   # one-time weight pad/cast
    out = positionwise_feed_forward(x, params)
    out = jax.block_until_ready(out)

    # Reference in plain JAX, mirroring the kernel's bf16 MXU operands / f32
    # accumulation (eval-mode dropout == identity).
    xb = x.reshape(-1, d_model).astype(jnp.bfloat16).astype(jnp.float32)
    w1b = w1.astype(jnp.bfloat16).astype(jnp.float32)
    w2b = w2.astype(jnp.bfloat16).astype(jnp.float32)
    h = jnp.maximum(xb @ w1b + b1, 0.0).astype(jnp.bfloat16).astype(jnp.float32)
    ref = (h @ w2b + b2).reshape(batch, seq, d_model)
    assert jnp.allclose(out, ref, atol=1e-2, rtol=1e-2), "mismatch vs reference"

    print("KERNEL_OK")
</pallas_src>

<mosaic_0001>
module attributes {stable_mosaic.version = 11 : i64} {
  func.func @ffn_kernel_resident(%arg0: i32, %arg1: memref<16x128xbf16, #tpu.memory_space<vmem>>, %arg2: memref<128x128xbf16, #tpu.memory_space<vmem>>, %arg3: memref<1x128xf32, #tpu.memory_space<vmem>>, %arg4: memref<128x128xbf16, #tpu.memory_space<vmem>>, %arg5: memref<1x128xf32, #tpu.memory_space<vmem>>, %arg6: memref<16x128xf32, #tpu.memory_space<vmem>>) attributes {dimension_semantics = [#tpu.dimension_semantics<parallel>], iteration_bounds = array<i64: 1>, scalar_prefetch = 0 : i64, scratch_operands = 0 : i64, tpu.core_type = #tpu.core_type<tc>, window_params = [{transform_indices = @transform_0, window_bounds = array<i64: 16, 128>}, {pipeline_mode = #tpu.pipeline_mode<synchronous>, transform_indices = @transform_1, window_bounds = array<i64: 128, 128>}, {pipeline_mode = #tpu.pipeline_mode<synchronous>, transform_indices = @transform_2, window_bounds = array<i64: 1, 128>}, {pipeline_mode = #tpu.pipeline_mode<synchronous>, transform_indices = @transform_3, window_bounds = array<i64: 128, 128>}, {pipeline_mode = #tpu.pipeline_mode<synchronous>, transform_indices = @transform_4, window_bounds = array<i64: 1, 128>}, {transform_indices = @transform_5, window_bounds = array<i64: 16, 128>}]} {
    %c0 = arith.constant 0 : index
    %c0_0 = arith.constant 0 : index
    %0 = vector.load %arg1[%c0, %c0_0] : memref<16x128xbf16, #tpu.memory_space<vmem>>, vector<16x128xbf16>
    %c0_1 = arith.constant 0 : index
    %c0_2 = arith.constant 0 : index
    %1 = vector.load %arg2[%c0_1, %c0_2] : memref<128x128xbf16, #tpu.memory_space<vmem>>, vector<128x128xbf16>
    %cst = arith.constant dense<0.000000e+00> : vector<16x128xf32>
    %2 = tpu.matmul %0, %1, %cst {dimension_numbers = #tpu.dot_dimension_numbers<[1], [0], [0], [1], [0, 0, 1, 1], [], []>} : vector<16x128xbf16>, vector<128x128xbf16>, vector<16x128xf32> -> vector<16x128xf32>
    %c0_3 = arith.constant 0 : index
    %c0_4 = arith.constant 0 : index
    %3 = vector.load %arg3[%c0_3, %c0_4] : memref<1x128xf32, #tpu.memory_space<vmem>>, vector<1x128xf32>
    %4 = vector.broadcast %3 : vector<1x128xf32> to vector<16x128xf32>
    %5 = arith.addf %2, %4 : vector<16x128xf32>
    %cst_5 = arith.constant 0.000000e+00 : f32
    %6 = vector.broadcast %cst_5 : f32 to vector<16x128xf32>
    %7 = arith.maximumf %5, %6 : vector<16x128xf32>
    %8 = arith.truncf %7 : vector<16x128xf32> to vector<16x128xbf16>
    %c0_6 = arith.constant 0 : index
    %c0_7 = arith.constant 0 : index
    %9 = vector.load %arg4[%c0_6, %c0_7] : memref<128x128xbf16, #tpu.memory_space<vmem>>, vector<128x128xbf16>
    %cst_8 = arith.constant dense<0.000000e+00> : vector<16x128xf32>
    %10 = tpu.matmul %8, %9, %cst_8 {dimension_numbers = #tpu.dot_dimension_numbers<[1], [0], [0], [1], [0, 0, 1, 1], [], []>} : vector<16x128xbf16>, vector<128x128xbf16>, vector<16x128xf32> -> vector<16x128xf32>
    %c0_9 = arith.constant 0 : index
    %c0_10 = arith.constant 0 : index
    %11 = vector.load %arg5[%c0_9, %c0_10] : memref<1x128xf32, #tpu.memory_space<vmem>>, vector<1x128xf32>
    %12 = vector.broadcast %11 : vector<1x128xf32> to vector<16x128xf32>
    %13 = arith.addf %10, %12 : vector<16x128xf32>
    %c0_11 = arith.constant 0 : index
    %c0_12 = arith.constant 0 : index
    %14 = vector.load %arg6[%c0_11, %c0_12] : memref<16x128xf32, #tpu.memory_space<vmem>>, vector<16x128xf32>
    tpu.vector_store %arg6[%c0_11, %c0_12], %13 {strides = array<i32>} : memref<16x128xf32, #tpu.memory_space<vmem>>, vector<16x128xf32>,
    return
  }
  func.func @transform_0(%arg0: i32) -> (i32, i32) {
    %c0_i32 = arith.constant 0 : i32
    %c0_i32_0 = arith.constant 0 : i32
    return %arg0, %c0_i32 : i32, i32
  }
  func.func @transform_1(%arg0: i32) -> (i32, i32) {
    %c0_i32 = arith.constant 0 : i32
    %c0_i32_0 = arith.constant 0 : i32
    %c0_i32_1 = arith.constant 0 : i32
    return %c0_i32, %c0_i32_0 : i32, i32
  }
  func.func @transform_2(%arg0: i32) -> (i32, i32) {
    %c0_i32 = arith.constant 0 : i32
    %c0_i32_0 = arith.constant 0 : i32
    %c0_i32_1 = arith.constant 0 : i32
    return %c0_i32, %c0_i32_0 : i32, i32
  }
  func.func @transform_3(%arg0: i32) -> (i32, i32) {
    %c0_i32 = arith.constant 0 : i32
    %c0_i32_0 = arith.constant 0 : i32
    %c0_i32_1 = arith.constant 0 : i32
    return %c0_i32, %c0_i32_0 : i32, i32
  }
  func.func @transform_4(%arg0: i32) -> (i32, i32) {
    %c0_i32 = arith.constant 0 : i32
    %c0_i32_0 = arith.constant 0 : i32
    %c0_i32_1 = arith.constant 0 : i32
    return %c0_i32, %c0_i32_0 : i32, i32
  }
  func.func @transform_5(%arg0: i32) -> (i32, i32) {
    %c0_i32 = arith.constant 0 : i32
    %c0_i32_0 = arith.constant 0 : i32
    return %arg0, %c0_i32 : i32, i32
  }
}

</mosaic_0001>

<llo_original>
// kernel: tpu_custom_call.1
$region0: #{tpu_custom_call.1}
  #allocation0 [shape = 'u32[]', space=smem, size = 0x4, offset = 0x4, fixed_abs, tag = 'smem constant byte address 0x4 - core index']
  #allocation1 [shape = 'u32[72,128]{1,0:T(1,128)}', space=vmem, size = 0x9000, scoped, tag = 'internal scratch']
  %s0 = inlined_call_operand.hbm [shape: bf16[16,128], index: 0, kind: input, shape index: {}]
  %s1 = inlined_call_operand.hbm [shape: bf16[128,128], index: 1, kind: input, shape index: {}]
  %s2 = inlined_call_operand.vmem [shape: f32[1,128], index: 2, kind: input, shape index: {}]
  %s3 = inlined_call_operand.hbm [shape: bf16[128,128], index: 3, kind: input, shape index: {}]
  %s4 = inlined_call_operand.vmem [shape: f32[1,128], index: 4, kind: input, shape index: {}]
  %s5 = inlined_call_operand.hbm [shape: f32[16,128], index: 5, kind: output, shape index: {}]
  %s6 = sld [smem:[#allocation0]]
  $region42: #{tpu_custom_call.1} parent=0
    _
  %s8 = ssub.s32 1, %s6
  %s9 = scalar_select 0, %s8, %s6
  $region1: #{tpu_custom_call.1} parent=0
    #allocation2 [shape = 'u8[4096]{0}', space=vmem, size = 0x1000, scoped, tag = 'input window, operand 0, single buffered']
    #allocation3 [shape = 's32[1]{0}', space=sflag, size = 0x4, scoped, tag = 'scoped memory for tpu_custom_call.1']
    #allocation4 [shape = 's32[1]{0}', space=sflag, size = 0x4, scoped, tag = 'scoped memory for tpu_custom_call.1']
    #allocation5 [shape = 'u8[32768]{0}', space=vmem, size = 0x8000, scoped, tag = 'input window, operand 1, single buffered']
    #allocation6 [shape = 's32[1]{0}', space=sflag, size = 0x4, scoped, tag = 'scoped memory for tpu_custom_call.1']
    #allocation7 [shape = 'u8[32768]{0}', space=vmem, size = 0x8000, scoped, tag = 'input window, operand 3, single buffered']
    #allocation8 [shape = 'u8[8192]{0}', space=vmem, size = 0x2000, scoped, tag = 'output window, operand 0, single buffered']
    %10 = vsyncpa [#allocation3], 0
    %11 = vsyncpa [#allocation6], 0
    %12 = vsyncpa [#allocation4], 0
    // Predicated region
    $region2: #{tpu_custom_call.1} parent=1 // pred_check
      _
    $region3: #{tpu_custom_call.1} parent=1 // pred_check_branch
      %14 = sbr.rel (0) target = $region5
    $region4: #{tpu_custom_call.1} parent=1 // pred_region
      %16 = vsyncadd [#allocation3], 0
      %s17 = sshll.u32 %s0, 4
      %s18 = int_to_ptr.hbm [resolvable:$true] %s17
      %s19 = sshll.u32 [#allocation2], 4
      %s20 = int_to_ptr.vmem [resolvable:$true] %s19
      %25 = dma.hbm_to_vmem [thread:$0]  %s18, 128, %s20, [#allocation3], 64, 64, 4
    $region5: #{tpu_custom_call.1} parent=1 // pred_fallthru
      _
    // Predicated region
    $region6: #{tpu_custom_call.1} parent=1 // pred_check
      _
    $region7: #{tpu_custom_call.1} parent=1 // pred_check_branch
      %27 = sbr.rel (0) target = $region9
    $region8: #{tpu_custom_call.1} parent=1 // pred_region
      %29 = vsyncadd [#allocation6], 0
      %s30 = sshll.u32 %s1, 4
      %s31 = int_to_ptr.hbm [resolvable:$true] %s30
      %s32 = sshll.u32 [#allocation5], 4
      %s33 = int_to_ptr.vmem [resolvable:$true] %s32
      %38 = dma.hbm_to_vmem [thread:$0]  %s31, 1024, %s33, [#allocation6], 64, 64, 4
    $region9: #{tpu_custom_call.1} parent=1 // pred_fallthru
      _
    // Predicated region
    $region10: #{tpu_custom_call.1} parent=1 // pred_check
      _
    $region11: #{tpu_custom_call.1} parent=1 // pred_check_branch
      %40 = sbr.rel (0) target = $region13
    $region12: #{tpu_custom_call.1} parent=1 // pred_region
      _
    $region13: #{tpu_custom_call.1} parent=1 // pred_fallthru
      _
    // Predicated region
    $region14: #{tpu_custom_call.1} parent=1 // pred_check
      _
    $region15: #{tpu_custom_call.1} parent=1 // pred_check_branch
      %42 = sbr.rel (0) target = $region17
    $region16: #{tpu_custom_call.1} parent=1 // pred_region
      %44 = vsyncadd [#allocation6], 0
      %s45 = sshll.u32 %s3, 4
      %s46 = int_to_ptr.hbm [resolvable:$true] %s45
      %s47 = sshll.u32 [#allocation7], 4
      %s48 = int_to_ptr.vmem [resolvable:$true] %s47
      %53 = dma.hbm_to_vmem [thread:$0]  %s46, 1024, %s48, [#allocation6], 64, 64, 4
    $region17: #{tpu_custom_call.1} parent=1 // pred_fallthru
      _
    // Predicated region
    $region18: #{tpu_custom_call.1} parent=1 // pred_check
      _
    $region19: #{tpu_custom_call.1} parent=1 // pred_check_branch
      %55 = sbr.rel (0) target = $region21
    $region20: #{tpu_custom_call.1} parent=1 // pred_region
      _
    $region21: #{tpu_custom_call.1} parent=1 // pred_fallthru
      _
    // Predicated region
    $region22: #{tpu_custom_call.1} parent=1 // pred_check
      _
    $region23: #{tpu_custom_call.1} parent=1 // pred_check_branch
      %57 = sbr.rel (0) target = $region25
    $region24: #{tpu_custom_call.1} parent=1 // pred_region
      %59 = dma.done [#allocation3], 128
    $region25: #{tpu_custom_call.1} parent=1 // pred_fallthru
      _
    // Predicated region
    $region26: #{tpu_custom_call.1} parent=1 // pred_check
      _
    $region27: #{tpu_custom_call.1} parent=1 // pred_check_branch
      %61 = sbr.rel (0) target = $region29
    $region28: #{tpu_custom_call.1} parent=1 // pred_region
      %63 = dma.done [#allocation6], 1024
    $region29: #{tpu_custom_call.1} parent=1 // pred_fallthru
      _
    // Predicated region
    $region30: #{tpu_custom_call.1} parent=1 // pred_check
      _
    $region31: #{tpu_custom_call.1} parent=1 // pred_check_branch
      %65 = sbr.rel (0) target = $region33
    $region32: #{tpu_custom_call.1} parent=1 // pred_region
      %67 = dma.done [#allocation6], 1024
    $region33: #{tpu_custom_call.1} parent=1 // pred_fallthru
      _
    %v68 = vld [vmem:[#allocation2] sm:$0xf]
    %v69 = vld [vmem:[#allocation2 + $0x4] sm:$0xf]
    %v70 = vld [vmem:[#allocation5] sm:$0xf]
    %v71 = vld [vmem:[#allocation5 + $0x4] sm:$0xf]
    %v72 = vld [vmem:[#allocation5 + $0x8] sm:$0xf]
    %v73 = vld [vmem:[#allocation5 + $0xc] sm:$0xf]
    %v74 = vld [vmem:[#allocation5 + $0x10] sm:$0xf]
    %v75 = vld [vmem:[#allocation5 + $0x14] sm:$0xf]
    %v76 = vld [vmem:[#allocation5 + $0x18] sm:$0xf]
    %v77 = vld [vmem:[#allocation5 + $0x1c] sm:$0xf]
    %v78 = vld [vmem:[#allocation5 + $0x20] sm:$0xf]
    %v79 = vld [vmem:[#allocation5 + $0x24] sm:$0xf]
    %v80 = vld [vmem:[#allocation5 + $0x28] sm:$0xf]
    %v81 = vld [vmem:[#allocation5 + $0x2c] sm:$0xf]
    %v82 = vld [vmem:[#allocation5 + $0x30] sm:$0xf]
    %v83 = vld [vmem:[#allocation5 + $0x34] sm:$0xf]
    %v84 = vld [vmem:[#allocation5 + $0x38] sm:$0xf]
    %v85 = vld [vmem:[#allocation5 + $0x3c] sm:$0xf]
    %v86 = vld [vmem:[%s2] sm:$0x1]
    %v88 = vperm.slane %v86, 0
    %v92 = vunpack.c.l.b16 %v68
    %v93 = vunpack.c.l.b16 %v69
    %v94 = vpack.c.b16 %v93, %v92
    %v112 = vunpack.c.l.b16 %v70
    %v113 = vunpack.c.l.b16 %v71
    %v114 = vunpack.c.l.b16 %v72
    %v115 = vunpack.c.l.b16 %v73
    %v116 = vunpack.c.l.b16 %v74
    %v117 = vunpack.c.l.b16 %v75
    %v118 = vunpack.c.l.b16 %v76
    %v119 = vunpack.c.l.b16 %v77
    %v120 = vunpack.c.l.b16 %v78
    %v121 = vunpack.c.l.b16 %v79
    %v122 = vunpack.c.l.b16 %v80
    %v123 = vunpack.c.l.b16 %v81
    %v124 = vunpack.c.l.b16 %v82
    %v125 = vunpack.c.l.b16 %v83
    %v126 = vunpack.c.l.b16 %v84
    %v127 = vunpack.c.l.b16 %v85
    %v128 = vpack.c.b16 %v113, %v112
    %v129 = vpack.c.b16 %v115, %v114
    %v130 = vpack.c.b16 %v117, %v116
    %v131 = vpack.c.b16 %v119, %v118
    %v132 = vpack.c.b16 %v121, %v120
    %v133 = vpack.c.b16 %v123, %v122
    %v134 = vpack.c.b16 %v125, %v124
    %v135 = vpack.c.b16 %v127, %v126
    %144 = vmatpush.bf16.msra.mxu0 %v135
    %145 = vmatpush.bf16.msra.mxu0 %v134
    %146 = vmatpush.bf16.msra.mxu0 %v133
    %147 = vmatpush.bf16.msra.mxu0 %v132
    %148 = vmatpush.bf16.msra.mxu0 %v131
    %149 = vmatpush.bf16.msra.mxu0 %v130
    %150 = vmatpush.bf16.msra.mxu0 %v129
    %151 = vmatpush.bf16.msra.mxu0 %v128
    %152 = vmatmul.bf16.gmra.mxu0 %v94
    %v153 = vpop.f32.mrf.mxu0
    %v154 = vadd.f32 %v88, %v153
    %v155 = vpop.f32.mrf.mxu0
    %v156 = vadd.f32 %v88, %v155
    %157 = vdwg.mxu0
    %v158 = vmax.f32 %v154, 0.0
    %v159 = vmax.f32 %v156, 0.0
    %v160 = vpack.c.bf16 %v159, %v158
    %v161 = vld [vmem:[#allocation7] sm:$0xf]
    %v162 = vld [vmem:[#allocation7 + $0x4] sm:$0xf]
    %v163 = vld [vmem:[#allocation7 + $0x8] sm:$0xf]
    %v164 = vld [vmem:[#allocation7 + $0xc] sm:$0xf]
    %v165 = vld [vmem:[#allocation7 + $0x10] sm:$0xf]
    %v166 = vld [vmem:[#allocation7 + $0x14] sm:$0xf]
    %v167 = vld [vmem:[#allocation7 + $0x18] sm:$0xf]
    %v168 = vld [vmem:[#allocation7 + $0x1c] sm:$0xf]
    %v169 = vld [vmem:[#allocation7 + $0x20] sm:$0xf]
    %v170 = vld [vmem:[#allocation7 + $0x24] sm:$0xf]
    %v171 = vld [vmem:[#allocation7 + $0x28] sm:$0xf]
    %v172 = vld [vmem:[#allocation7 + $0x2c] sm:$0xf]
    %v173 = vld [vmem:[#allocation7 + $0x30] sm:$0xf]
    %v174 = vld [vmem:[#allocation7 + $0x34] sm:$0xf]
    %v175 = vld [vmem:[#allocation7 + $0x38] sm:$0xf]
    %v176 = vld [vmem:[#allocation7 + $0x3c] sm:$0xf]
    %v177 = vld [vmem:[%s4] sm:$0x1]
    %v179 = vperm.slane %v177, 0
    %v197 = vunpack.c.l.b16 %v161
    %v198 = vunpack.c.l.b16 %v162
    %v199 = vunpack.c.l.b16 %v163
    %v200 = vunpack.c.l.b16 %v164
    %v201 = vunpack.c.l.b16 %v165
    %v202 = vunpack.c.l.b16 %v166
    %v203 = vunpack.c.l.b16 %v167
    %v204 = vunpack.c.l.b16 %v168
    %v205 = vunpack.c.l.b16 %v169
    %v206 = vunpack.c.l.b16 %v170
    %v207 = vunpack.c.l.b16 %v171
    %v208 = vunpack.c.l.b16 %v172
    %v209 = vunpack.c.l.b16 %v173
    %v210 = vunpack.c.l.b16 %v174
    %v211 = vunpack.c.l.b16 %v175
    %v212 = vunpack.c.l.b16 %v176
    %v213 = vpack.c.b16 %v198, %v197
    %v214 = vpack.c.b16 %v200, %v199
    %v215 = vpack.c.b16 %v202, %v201
    %v216 = vpack.c.b16 %v204, %v203
    %v217 = vpack.c.b16 %v206, %v205
    %v218 = vpack.c.b16 %v208, %v207
    %v219 = vpack.c.b16 %v210, %v209
    %v220 = vpack.c.b16 %v212, %v211
    %229 = vmatpush.bf16.msra.mxu0 %v220
    %230 = vmatpush.bf16.msra.mxu0 %v219
    %231 = vmatpush.bf16.msra.mxu0 %v218
    %232 = vmatpush.bf16.msra.mxu0 %v217
    %233 = vmatpush.bf16.msra.mxu0 %v216
    %234 = vmatpush.bf16.msra.mxu0 %v215
    %235 = vmatpush.bf16.msra.mxu0 %v214
    %236 = vmatpush.bf16.msra.mxu0 %v213
    %237 = vmatmul.bf16.gmra.mxu0 %v160
    %v238 = vpop.f32.mrf.mxu0
    %v239 = vadd.f32 %v179, %v238
    %v240 = vpop.f32.mrf.mxu0
    %v241 = vadd.f32 %v179, %v240
    %242 = vdwg.mxu0
    %243 = vst [vmem:[#allocation8] sm:$0xff] %v239
    %244 = vst [vmem:[#allocation8 + $0x8] sm:$0xff] %v241
    // Predicated region
    $region34: #{tpu_custom_call.1} parent=1 // pred_check
      _
    $region35: #{tpu_custom_call.1} parent=1 // pred_check_branch
      %246 = sbr.rel (0) target = $region37
    $region36: #{tpu_custom_call.1} parent=1 // pred_region
      %248 = vsyncadd [#allocation4], 0
      %s249 = sshll.u32 [#allocation8], 4
      %s250 = int_to_ptr.vmem [resolvable:$true] %s249
      %s251 = sshll.u32 %s5, 4
      %s252 = int_to_ptr.hbm [resolvable:$true] %s251
      %257 = dma.vmem_to_hbm [thread:$0]  %s250, 256, %s252, [#allocation4], 128, 128, 8
    $region37: #{tpu_custom_call.1} parent=1 // pred_fallthru
      _
    // Predicated region
    $region38: #{tpu_custom_call.1} parent=1 // pred_check
      _
    $region39: #{tpu_custom_call.1} parent=1 // pred_check_branch
      %259 = sbr.rel (0) target = $region41
    $region40: #{tpu_custom_call.1} parent=1 // pred_region
      %261 = dma.done [#allocation4], 256
    $region41: #{tpu_custom_call.1} parent=1 // pred_fallthru
      _
    %262 = vsyncpa [#allocation3], 1
    %263 = vsyncpa [#allocation6], 1
    %264 = vsyncpa [#allocation4], 1

</llo_original>
